<compile_context>
chip_gen: v7x
topology: tpu7x:2x2x1
jax: 0.10.0
libtpu: 0.0.40
codegen_flags: <defaults>
</compile_context>

<pallas_src>
import math

import jax
import jax.numpy as jnp
from jax.experimental import pallas as pl
from jax.experimental.pallas import tpu as pltpu


def _linear_with_channel_kernel(x_ref, w_ref, b_ref, o_ref):
    # x_ref: (tB, g*I)      lane-packed activations for one channel group
    # w_ref: (1, g*I, g*O)  block-diagonal, pre-transposed weight (K, N) layout
    # b_ref: (1, g*O)       lane-packed bias
    # o_ref: (tB, g*O)      lane-packed output
    acc = jnp.dot(x_ref[...], w_ref[0], preferred_element_type=jnp.float32)
    o_ref[...] = (acc + b_ref[...].astype(jnp.float32)).astype(o_ref.dtype)


def _round_up(n, m):
    return -(-n // m) * m


def _vmem_capacity_bytes():
    try:
        return int(pltpu.get_tpu_info().vmem_capacity_bytes)
    except Exception:
        return 64 * 1024 * 1024  # conservative default: v7x per-TC capacity


def _choose_group(C, I, O, w_itemsize, w_block_budget):
    """Pick (g, G): channels per block-diagonal group and number of groups."""
    # (a) Pack everything into a single block-diagonal matmul if it fits;
    #     full-array blocks are always layout-legal.
    if (C * I) * (C * O) * w_itemsize <= w_block_budget:
        return C, 1
    # (b) Otherwise group channels so K = g*I and N = g*O are 128-aligned and
    #     K approaches the MXU's 256-deep contraction (v6e/v7x).
    g_align = math.lcm(128 // math.gcd(I, 128), 128 // math.gcd(O, 128))
    g = g_align
    c_cap = _round_up(C, g_align)
    while (g * I < 256
           and g + g_align <= c_cap
           and ((g + g_align) * I) * ((g + g_align) * O) * w_itemsize
               <= w_block_budget):
        g += g_align
    G = -(-C // g)
    return g, G


def _choose_batch_tile(B, G, gI, gO, x_itemsize, o_itemsize, budget):
    """Pick tB under a VMEM budget that counts double buffers + f32 temps."""
    # Sublane multiple for the streamed (batch-major) operands: 8 f32 / 16 bf16 / 32 int8.
    sub = max(8, 32 // min(x_itemsize, o_itemsize))
    # Per-row cost: double-buffered x + out blocks, plus the in-kernel f32
    # accumulator and epilogue temporary.
    per_row = 2 * (gI * x_itemsize + gO * o_itemsize) + 2 * gO * 4
    # Resident weight + bias (count double buffers, f32 worst case).
    fixed = 2 * (gI * gO + gO) * 4
    avail = max(budget - fixed, per_row * sub)
    tB = int(avail // per_row)
    tB = min(tB, 1024, B)
    if tB < B:
        tB = max(sub, (tB // sub) * sub)
    if tB >= B:
        tB = B
        # v7x has 2 TensorCores: when the group axis is trivial, make sure the
        # "parallel" batch axis has >= 2 tiles so both cores get work.
        if G == 1 and B >= 2 * sub:
            half = _round_up(-(-B // 2), sub)
            if half < B:
                tB = half
    return tB


def linear_with_channel(x, weight, bias, *, force_pallas=False):
    """x: (..., C, I), weight: (C, O, I), bias: (C, O) -> (..., C, O)."""
    assert x.ndim >= 2, "Requires (..., channel, features) shape."
    C, O, I = weight.shape
    assert x.shape[-2] == C and x.shape[-1] == I

    batch_dims = x.shape[:-2]
    B = int(math.prod(batch_dims)) if batch_dims else 1

    # Tiny-problem fallback: per-grid-step + launch overhead dwarfs the work.
    if not force_pallas and (B < 64 or B * C * I * O < (1 << 20)):
        out = jnp.einsum("coi,...ci->...co", weight, x) + bias
        return out.astype(x.dtype)

    cap = _vmem_capacity_bytes()
    vmem_limit = int(cap * 0.85)      # headroom under physical capacity
    tile_budget = int(cap * 0.55)     # budget used for tile selection

    x_item = jnp.dtype(x.dtype).itemsize
    w_item = jnp.dtype(weight.dtype).itemsize
    o_item = x_item

    g, G = _choose_group(C, I, O, w_item, tile_budget // 4)
    C_pad = g * G
    gI, gO = g * I, g * O

    # --- One-time packing in the wrapper (plain XLA ops) ---------------------
    x3 = x.reshape(B, C, I)
    wt = jnp.transpose(weight, (0, 2, 1))          # (C, I, O): canonical (K, N)
    b2 = bias
    if C_pad > C:
        pad = C_pad - C
        x3 = jnp.pad(x3, ((0, 0), (0, pad), (0, 0)))
        wt = jnp.pad(wt, ((0, pad), (0, 0), (0, 0)))
        b2 = jnp.pad(b2, ((0, pad), (0, 0)))
    x2d = x3.reshape(B, C_pad * I)                 # lane-packed activations
    b2d = b2.reshape(1, C_pad * O)                 # lane-packed bias
    eye = jnp.eye(g, dtype=wt.dtype)
    w_bd = jnp.einsum("gcio,cd->gcido", wt.reshape(G, g, I, O), eye)
    w_bd = w_bd.reshape(G, gI, gO)                 # block-diagonal (K, N) slabs

    tB = _choose_batch_tile(B, G, gI, gO, x_item, o_item, tile_budget)
    grid = (G, pl.cdiv(B, tB))                     # batch innermost: weight stays resident

    out2d = pl.pallas_call(
        _linear_with_channel_kernel,
        out_shape=jax.ShapeDtypeStruct((B, C_pad * O), x.dtype),
        grid_spec=pltpu.PrefetchScalarGridSpec(
            num_scalar_prefetch=0,
            grid=grid,
            in_specs=[
                pl.BlockSpec((tB, gI), lambda gi, bi: (bi, gi)),       # activations
                pl.BlockSpec((1, gI, gO), lambda gi, bi: (gi, 0, 0)),  # weight (resident over bi)
                pl.BlockSpec((1, gO), lambda gi, bi: (0, gi)),         # bias   (resident over bi)
            ],
            out_specs=pl.BlockSpec((tB, gO), lambda gi, bi: (bi, gi)),
        ),
        compiler_params=pltpu.CompilerParams(
            dimension_semantics=("parallel", "parallel"),
            vmem_limit_bytes=vmem_limit,
        ),
    )(x2d, w_bd, b2d)

    out = out2d.reshape(B, C_pad, O)[:, :C, :]
    return out.reshape(*batch_dims, C, O)


def init_params(key, channel_size, input_size, output_size):
    """Matches the PyTorch module's reset_parameters.

    kaiming_uniform_(a=sqrt(3)) on weight (C, O, I):
      gain = sqrt(2 / (1 + a^2)) = sqrt(1/2)
      fan_in (PyTorch convention for a 3D tensor) = size(1) * prod(size(2:)) = O * I
      bound_w = gain * sqrt(3 / fan_in)
    bias ~ U(-1/sqrt(fan_in), 1/sqrt(fan_in))
    """
    kw, kb = jax.random.split(key)
    fan_in = output_size * input_size
    gain = math.sqrt(2.0 / (1.0 + 3.0))
    bound_w = gain * math.sqrt(3.0 / fan_in)
    bound_b = 1.0 / math.sqrt(fan_in)
    weight = jax.random.uniform(
        kw, (channel_size, output_size, input_size), jnp.float32,
        minval=-bound_w, maxval=bound_w)
    bias = jax.random.uniform(
        kb, (channel_size, output_size), jnp.float32,
        minval=-bound_b, maxval=bound_b)
    return weight, bias


if __name__ == "__main__":
    key = jax.random.PRNGKey(0)
    k_x, k_p, k_x2 = jax.random.split(key, 3)

    # Small shapes consistent with the module's forward: (batch, channel, features).
    batch, channels, input_size, output_size = 2, 4, 16, 32
    x = jax.random.normal(k_x, (batch, channels, input_size), jnp.float32)
    weight, bias = init_params(k_p, channels, input_size, output_size)

    # Force the Pallas path even at this tiny size so the kernel itself runs.
    out = jax.block_until_ready(linear_with_channel(x, weight, bias, force_pallas=True))
    ref = jnp.einsum("coi,bci->bco", weight, x) + bias[None, :, :]
    assert out.shape == (batch, channels, output_size)
    assert jnp.allclose(out, ref, atol=1e-5, rtol=1e-5)

    # Larger batch: exercises the tiled path (multiple batch tiles, resident weight).
    big_b = 512
    x_big = jax.random.normal(k_x2, (big_b, channels, input_size), jnp.float32)
    out_big = jax.block_until_ready(linear_with_channel(x_big, weight, bias))
    ref_big = jnp.einsum("coi,bci->bco", weight, x_big) + bias[None, :, :]
    assert jnp.allclose(out_big, ref_big, atol=1e-5, rtol=1e-4)

    print("KERNEL_OK")
</pallas_src>

<mosaic_0001>
module attributes {stable_mosaic.version = 11 : i64} {
  func.func @_linear_with_channel_kernel(%arg0: i32, %arg1: i32, %arg2: memref<2x64xf32, #tpu.memory_space<vmem>>, %arg3: memref<1x64x128xf32, #tpu.memory_space<vmem>>, %arg4: memref<1x128xf32, #tpu.memory_space<vmem>>, %arg5: memref<2x128xf32, #tpu.memory_space<vmem>>) attributes {dimension_semantics = [#tpu.dimension_semantics<parallel>, #tpu.dimension_semantics<parallel>], iteration_bounds = array<i64: 1, 1>, scalar_prefetch = 0 : i64, scratch_operands = 0 : i64, tpu.core_type = #tpu.core_type<tc>, window_params = [{transform_indices = @transform_0, window_bounds = array<i64: 2, 64>}, {transform_indices = @transform_1, window_bounds = array<i64: 1, 64, 128>}, {transform_indices = @transform_2, window_bounds = array<i64: 1, 128>}, {transform_indices = @transform_3, window_bounds = array<i64: 2, 128>}]} {
    %c0 = arith.constant 0 : index
    %c0_0 = arith.constant 0 : index
    %0 = vector.load %arg2[%c0, %c0_0] : memref<2x64xf32, #tpu.memory_space<vmem>>, vector<2x64xf32>
    %c0_1 = arith.constant 0 : index
    %c0_2 = arith.constant 0 : index
    %c0_3 = arith.constant 0 : index
    %1 = vector.load %arg3[%c0_1, %c0_2, %c0_3] : memref<1x64x128xf32, #tpu.memory_space<vmem>>, vector<1x64x128xf32>
    %2 = vector.shape_cast %1 : vector<1x64x128xf32> to vector<64x128xf32>
    %cst = arith.constant dense<0.000000e+00> : vector<2x128xf32>
    %3 = tpu.matmul %0, %2, %cst {dimension_numbers = #tpu.dot_dimension_numbers<[1], [0], [0], [1], [0, 0, 1, 1], [], []>} : vector<2x64xf32>, vector<64x128xf32>, vector<2x128xf32> -> vector<2x128xf32>
    %c0_4 = arith.constant 0 : index
    %c0_5 = arith.constant 0 : index
    %4 = vector.load %arg4[%c0_4, %c0_5] : memref<1x128xf32, #tpu.memory_space<vmem>>, vector<1x128xf32>
    %5 = vector.broadcast %4 : vector<1x128xf32> to vector<2x128xf32>
    %6 = arith.addf %3, %5 : vector<2x128xf32>
    %c0_6 = arith.constant 0 : index
    %c0_7 = arith.constant 0 : index
    %7 = vector.load %arg5[%c0_6, %c0_7] : memref<2x128xf32, #tpu.memory_space<vmem>>, vector<2x128xf32>
    tpu.vector_store %arg5[%c0_6, %c0_7], %6 {strides = array<i32>} : memref<2x128xf32, #tpu.memory_space<vmem>>, vector<2x128xf32>,
    return
  }
  func.func @transform_0(%arg0: i32, %arg1: i32) -> (i32, i32) {
    %c0_i32 = arith.constant 0 : i32
    return %arg1, %arg0 : i32, i32
  }
  func.func @transform_1(%arg0: i32, %arg1: i32) -> (i32, i32, i32) {
    %c0_i32 = arith.constant 0 : i32
    %c0_i32_0 = arith.constant 0 : i32
    %c0_i32_1 = arith.constant 0 : i32
    return %arg0, %c0_i32, %c0_i32_0 : i32, i32, i32
  }
  func.func @transform_2(%arg0: i32, %arg1: i32) -> (i32, i32) {
    %c0_i32 = arith.constant 0 : i32
    %c0_i32_0 = arith.constant 0 : i32
    return %c0_i32, %arg0 : i32, i32
  }
  func.func @transform_3(%arg0: i32, %arg1: i32) -> (i32, i32) {
    %c0_i32 = arith.constant 0 : i32
    return %arg1, %arg0 : i32, i32
  }
}

</mosaic_0001>

<llo_original>
// kernel: tpu_custom_call.1
$region0: #{tpu_custom_call.1}
  #allocation0 [shape = 'u32[]', space=smem, size = 0x4, offset = 0x4, fixed_abs, tag = 'smem constant byte address 0x4 - core index']
  #allocation1 [shape = 'u32[144,128]{1,0:T(1,128)}', space=vmem, size = 0x12000, scoped, tag = 'internal scratch']
  %s0 = inlined_call_operand.hbm [shape: f32[2,64], index: 0, kind: input, shape index: {}]
  %s1 = inlined_call_operand.hbm [shape: f32[1,64,128], index: 1, kind: input, shape index: {}]
  %s2 = inlined_call_operand.vmem [shape: f32[1,128], index: 2, kind: input, shape index: {}]
  %s3 = inlined_call_operand.hbm [shape: f32[2,128], index: 3, kind: output, shape index: {}]
  %s4 = sld [smem:[#allocation0]]
  $region30: #{tpu_custom_call.1} parent=0
    _
  %s6 = ssub.s32 1, %s4
  %s7 = scalar_select 0, %s6, %s4
  $region1: #{tpu_custom_call.1} parent=0
    #allocation2 [shape = 'u8[1024]{0}', space=vmem, size = 0x400, scoped, tag = 'input window, operand 0, single buffered']
    #allocation3 [shape = 's32[1]{0}', space=sflag, size = 0x4, scoped, tag = 'scoped memory for tpu_custom_call.1']
    #allocation4 [shape = 's32[1]{0}', space=sflag, size = 0x4, scoped, tag = 'scoped memory for tpu_custom_call.1']
    #allocation5 [shape = 'u8[32768]{0}', space=vmem, size = 0x8000, scoped, tag = 'input window, operand 1, single buffered']
    #allocation6 [shape = 's32[1]{0}', space=sflag, size = 0x4, scoped, tag = 'scoped memory for tpu_custom_call.1']
    #allocation7 [shape = 'u8[1024]{0}', space=vmem, size = 0x400, scoped, tag = 'output window, operand 0, single buffered']
    %8 = vsyncpa [#allocation3], 0
    %9 = vsyncpa [#allocation6], 0
    %10 = vsyncpa [#allocation4], 0
    // Predicated region
    $region2: #{tpu_custom_call.1} parent=1 // pred_check
      _
    $region3: #{tpu_custom_call.1} parent=1 // pred_check_branch
      %12 = sbr.rel (0) target = $region5
    $region4: #{tpu_custom_call.1} parent=1 // pred_region
      %s14 = ssub.s32 32, 32
      %15 = vsyncadd [#allocation3], %s14
      %s17 = sshll.u32 [#allocation2], 4
      %s18 = int_to_ptr.vmem [resolvable:$true] %s17
      %20 = dma.hbm_to_vmem [thread:$0]  %s0, 32, %s18, [#allocation3]
    $region5: #{tpu_custom_call.1} parent=1 // pred_fallthru
      _
    // Predicated region
    $region6: #{tpu_custom_call.1} parent=1 // pred_check
      _
    $region7: #{tpu_custom_call.1} parent=1 // pred_check_branch
      %22 = sbr.rel (0) target = $region9
    $region8: #{tpu_custom_call.1} parent=1 // pred_region
      %s24 = ssub.s32 1024, 1024
      %25 = vsyncadd [#allocation6], %s24
      %s26 = sshll.u32 [#allocation5], 4
      %s27 = int_to_ptr.vmem [resolvable:$true] %s26
      %32 = dma.hbm_to_vmem [thread:$0]  %s1, 1024, %s27, [#allocation6], 128, 128, 8
    $region9: #{tpu_custom_call.1} parent=1 // pred_fallthru
      _
    // Predicated region
    $region10: #{tpu_custom_call.1} parent=1 // pred_check
      _
    $region11: #{tpu_custom_call.1} parent=1 // pred_check_branch
      %34 = sbr.rel (0) target = $region13
    $region12: #{tpu_custom_call.1} parent=1 // pred_region
      _
    $region13: #{tpu_custom_call.1} parent=1 // pred_fallthru
      _
    // Predicated region
    $region14: #{tpu_custom_call.1} parent=1 // pred_check
      _
    $region15: #{tpu_custom_call.1} parent=1 // pred_check_branch
      %36 = sbr.rel (0) target = $region17
    $region16: #{tpu_custom_call.1} parent=1 // pred_region
      %37 = dma.done [#allocation3], 32
    $region17: #{tpu_custom_call.1} parent=1 // pred_fallthru
      _
    // Predicated region
    $region18: #{tpu_custom_call.1} parent=1 // pred_check
      _
    $region19: #{tpu_custom_call.1} parent=1 // pred_check_branch
      %39 = sbr.rel (0) target = $region21
    $region20: #{tpu_custom_call.1} parent=1 // pred_region
      %40 = dma.done [#allocation6], 1024
    $region21: #{tpu_custom_call.1} parent=1 // pred_fallthru
      _
    %v41 = vld [vmem:[#allocation2] sm:$0x3]
    %v42 = vld [vmem:[#allocation5] sm:$0xff]
    %v43 = vld [vmem:[#allocation5 + $0x8] sm:$0xff]
    %v44 = vld [vmem:[#allocation5 + $0x10] sm:$0xff]
    %v45 = vld [vmem:[#allocation5 + $0x18] sm:$0xff]
    %v46 = vld [vmem:[#allocation5 + $0x20] sm:$0xff]
    %v47 = vld [vmem:[#allocation5 + $0x28] sm:$0xff]
    %v48 = vld [vmem:[#allocation5 + $0x30] sm:$0xff]
    %v49 = vld [vmem:[#allocation5 + $0x38] sm:$0xff]
    %v50 = vld [vmem:[%s2] sm:$0x1]
    %v52 = vlaneseq
    %v53 = vshrl.u32 %v52, 7
    %v54 = vsub.s32 0, %v53
    %v55 = vrot.slane %v50, %v54
    %vm57 = vcmask 523264
    %v59 = vsel %vm57, %v41, 0
    %61 = vmatprep.subr.mxu0 0.0
    %62 = vmatpush1.msra.mxu0 %v42
    %63 = vmatprep.subr.mxu0 0.0
    %64 = vmatpush1.msra.mxu0 %v43
    %65 = vmatprep.subr.mxu0 0.0
    %66 = vmatpush1.msra.mxu0 %v44
    %67 = vmatprep.subr.mxu0 0.0
    %68 = vmatpush1.msra.mxu0 %v45
    %69 = vmatprep.subr.mxu0 0.0
    %70 = vmatpush1.msra.mxu0 %v46
    %71 = vmatprep.subr.mxu0 0.0
    %72 = vmatpush1.msra.mxu0 %v47
    %73 = vmatprep.subr.mxu0 0.0
    %74 = vmatpush1.msra.mxu0 %v48
    %75 = vmatprep.subr.mxu0 0.0
    %76 = vmatpush1.msra.mxu0 %v49
    %77 = vmatprep.subr.mxu0 0.0
    %78 = vmatpush1.msra.mxu0 0.0
    %79 = vmatprep.subr.mxu0 0.0
    %80 = vmatpush1.msra.mxu0 0.0
    %81 = vmatprep.subr.mxu0 0.0
    %82 = vmatpush1.msra.mxu0 0.0
    %83 = vmatprep.subr.mxu0 0.0
    %84 = vmatpush1.msra.mxu0 0.0
    %85 = vmatprep.subr.mxu0 0.0
    %86 = vmatpush1.msra.mxu0 0.0
    %87 = vmatprep.subr.mxu0 0.0
    %88 = vmatpush1.msra.mxu0 0.0
    %89 = vmatprep.subr.mxu0 0.0
    %90 = vmatpush1.msra.mxu0 0.0
    %91 = vmatprep.subr.mxu0 0.0
    %92 = vmatpush1.msra.mxu0 0.0
    %93 = vmatprep.subr.mxu0 0.0
    %94 = vmatpush1.msra.mxu0 0.0
    %95 = vmatprep.subr.mxu0 0.0
    %96 = vmatpush1.msra.mxu0 0.0
    %97 = vmatprep.subr.mxu0 0.0
    %98 = vmatpush1.msra.mxu0 0.0
    %99 = vmatprep.subr.mxu0 0.0
    %100 = vmatpush1.msra.mxu0 0.0
    %101 = vmatprep.subr.mxu0 0.0
    %102 = vmatpush1.msra.mxu0 0.0
    %103 = vmatprep.subr.mxu0 0.0
    %104 = vmatpush1.msra.mxu0 0.0
    %105 = vmatprep.subr.mxu0 0.0
    %106 = vmatpush1.msra.mxu0 0.0
    %107 = vmatprep.subr.mxu0 0.0
    %108 = vmatpush1.msra.mxu0 0.0
    %109 = vmatprep.subr.mxu0 0.0
    %110 = vmatpush1.msra.mxu0 0.0
    %111 = vmatprep.subr.mxu0 0.0
    %112 = vmatpush1.msra.mxu0 0.0
    %113 = vmatprep.subr.mxu0 0.0
    %114 = vmatpush1.msra.mxu0 0.0
    %115 = vmatprep.subr.mxu0 0.0
    %116 = vmatpush1.msra.mxu0 0.0
    %117 = vmatprep.subr.mxu0 0.0
    %118 = vmatpush1.msra.mxu0 0.0
    %119 = vmatprep.subr.mxu0 0.0
    %120 = vmatpush1.msra.mxu0 0.0
    %121 = vmatprep.subr.mxu0 0.0
    %122 = vmatpush1.msra.mxu0 0.0
    %123 = vmatprep.subr.mxu0 0.0
    %124 = vmatpush1.msra.mxu0 0.0
    %125 = vmatprep.mubr.f32.mxu0 0.0
    %126 = vmatmul.mubr.f32.gmra.mrb[0].mxu0 %v59
    %v127 = vpop.f32.mrb[0].mxu0
    %v128 = vadd.f32 %v55, %v127
    %v129 = vpop.f32.mrb[0].mxu0
    %130 = vdwg.mxu0
    %131 = vst [vmem:[#allocation7] sm:$0x3] %v128
    // Predicated region
    $region22: #{tpu_custom_call.1} parent=1 // pred_check
      _
    $region23: #{tpu_custom_call.1} parent=1 // pred_check_branch
      %133 = sbr.rel (0) target = $region25
    $region24: #{tpu_custom_call.1} parent=1 // pred_region
      %s135 = ssub.s32 32, 32
      %136 = vsyncadd [#allocation4], %s135
      %s138 = sshll.u32 [#allocation7], 4
      %s139 = int_to_ptr.vmem [resolvable:$true] %s138
      %141 = dma.vmem_to_hbm [thread:$0]  %s139, 32, %s3, [#allocation4]
    $region25: #{tpu_custom_call.1} parent=1 // pred_fallthru
      _
    // Predicated region
    $region26: #{tpu_custom_call.1} parent=1 // pred_check
      _
    $region27: #{tpu_custom_call.1} parent=1 // pred_check_branch
      %143 = sbr.rel (0) target = $region29
    $region28: #{tpu_custom_call.1} parent=1 // pred_region
      %144 = dma.done [#allocation4], 32
    $region29: #{tpu_custom_call.1} parent=1 // pred_fallthru
      _
    %145 = vsyncpa [#allocation3], 1
    %146 = vsyncpa [#allocation6], 1
    %147 = vsyncpa [#allocation4], 1

</llo_original>
